<compile_context>
chip_gen: v7x
topology: tpu7x:2x2x1
jax: 0.10.0
libtpu: 0.0.40
codegen_flags: <defaults>
</compile_context>

<pallas_src>
import functools
import math

import jax
import jax.numpy as jnp
import numpy as np
from jax.experimental import pallas as pl
from jax.experimental.pallas import tpu as pltpu


def _round_up(a: int, b: int) -> int:
    return ((a + b - 1) // b) * b


def _theta_f32(d_model: int, base: float) -> np.ndarray:
    """theta[i] = 1/base**(2i/d_model) in f32 (matches the torch buffer)."""
    i = np.arange(d_model // 2, dtype=np.float32)
    return (1.0 / (base ** (2.0 * i / np.float32(d_model)))).astype(np.float32)


@functools.lru_cache(maxsize=None)
def _mxu_table(d_model: int, base: float, k: int, k_pad: int):
    """(k_pad, k*d_model) f32 table for the MXU offload.

    row j (< k) : interleaved theta [t0,t0,t1,t1,...] placed in lane group
                  [j*d_model, (j+1)*d_model), zeros elsewhere.
    row k       : phase [0, -pi/2, 0, -pi/2, ...] tiled over all k groups.
    rows  > k   : zero padding so the contraction dim is a sublane multiple.
    """
    width = k * d_model
    theta_int = np.repeat(_theta_f32(d_model, base), 2)              # (d_model,)
    phase = np.tile(np.array([0.0, -np.pi / 2.0], np.float32), d_model // 2)
    tbl = np.zeros((k_pad, width), np.float32)
    for j in range(k):
        tbl[j, j * d_model:(j + 1) * d_model] = theta_int
    tbl[k, :] = np.tile(phase, k)
    return jnp.asarray(tbl)


def _sinusoidal_kernel(x_ref, tbl_ref, o_ref):
    # x_ref  : (tile_rows, k_pad) f32 -- cols 0..k-1 packed timesteps, col k = 1.0
    # tbl_ref: (k_pad, width)     f32 -- theta rows + phase row (see _mxu_table)
    # o_ref  : (tile_rows, width)
    #
    # angle[r, g*d_model + c] = x[r, g] * theta_int[c] + phase[c]
    # Broadcast + scale + phase-add ride the otherwise-idle MXU; precision
    # MUST be HIGHEST: a bf16 one-pass matmul on x ~ 1e3 gives O(1) angle
    # error and completely wrong sin/cos.
    angle = jax.lax.dot_general(
        x_ref[...], tbl_ref[...],
        dimension_numbers=(((1,), (0,)), ((), ())),
        precision=jax.lax.Precision.HIGHEST,
        preferred_element_type=jnp.float32)
    # One cos over a lane-dense tile; sin comes from the -pi/2 phase columns.
    o_ref[...] = jnp.cos(angle).astype(o_ref.dtype)


def sinusoidal_pos_emb(x, d_model: int, base: float = 100000.0,
                       out_dtype=jnp.float32):
    assert d_model % 2 == 0

    x_flat = jnp.asarray(x).astype(jnp.float32).reshape(-1)
    n = x_flat.shape[0]

    # Pack k timesteps per output row so the packed width is an exact multiple
    # of 128 lanes for every d_model (unmasked, lane-dense stores/writeback).
    width_lcm = d_model * 128 // math.gcd(d_model, 128)
    if width_lcm <= 8192:
        k = width_lcm // d_model
    else:
        # TODO(synk): pathological d_model (lcm with 128 is huge) falls back to
        # unpacked rows and masked partial stores.
        k = 1
    width = k * d_model
    k_pad = _round_up(k + 1, 8)       # matmul contraction dim, sublane-aligned

    rows = pl.cdiv(n, k)
    rows8 = _round_up(rows, 8)

    out_itemsize = jnp.dtype(out_dtype).itemsize
    # ~4 MiB output block per grid step; 2x out + 2x x + table + the in-kernel
    # matmul intermediate stays comfortably under the 32 MiB limit requested
    # below (and far under every generation's physical VMEM).
    target_rows = max(8, (4 * 1024 * 1024) // max(width * out_itemsize, 1))
    target_rows -= target_rows % 8
    target_rows = max(8, target_rows)
    # v7x: ensure >= 2 grid steps when there is enough work so the "parallel"
    # grid axis can be sharded across both TensorCores.
    half_rows = (rows8 // 2) - ((rows8 // 2) % 8)
    if half_rows >= 8:
        target_rows = min(target_rows, half_rows)

    tile_rows = min(target_rows, rows8)
    rows_padded = _round_up(rows, tile_rows)

    # Augmented LHS: [packed timesteps | 1.0 column | zero padding].
    n_padded = rows_padded * k
    if n_padded != n:
        x_flat = jnp.pad(x_flat, (0, n_padded - n))
    x2d = x_flat.reshape(rows_padded, k)
    x_aug = jnp.concatenate(
        [x2d,
         jnp.ones((rows_padded, 1), jnp.float32),
         jnp.zeros((rows_padded, k_pad - (k + 1)), jnp.float32)],
        axis=1)

    tbl = _mxu_table(d_model, float(base), k, k_pad)

    out_packed = pl.pallas_call(
        _sinusoidal_kernel,
        out_shape=jax.ShapeDtypeStruct((rows_padded, width), out_dtype),
        grid=(rows_padded // tile_rows,),
        in_specs=[
            pl.BlockSpec((tile_rows, k_pad), lambda i: (i, 0)),
            pl.BlockSpec((k_pad, width), lambda i: (0, 0)),   # VMEM-resident table
        ],
        out_specs=pl.BlockSpec((tile_rows, width), lambda i: (i, 0)),
        compiler_params=pltpu.CompilerParams(
            dimension_semantics=("parallel",),
            vmem_limit_bytes=32 * 1024 * 1024),
    )(x_aug, tbl)

    # Unpack: (rows_padded, k*d_model) -> (rows_padded*k, d_model); drop padding.
    return out_packed.reshape(rows_padded * k, d_model)[:n]


def _reference(x, d_model: int, base: float = 100000.0):
    theta = jnp.asarray(_theta_f32(d_model, base))
    xv = jnp.asarray(x).astype(jnp.float32).reshape(-1, 1) * theta   # (N, half)
    return jnp.stack((jnp.cos(xv), jnp.sin(xv)), axis=-1).reshape(xv.shape[0], d_model)


if __name__ == "__main__":
    base = 100000.0
    key0, key1 = jax.random.split(jax.random.PRNGKey(0))

    # Tolerance note: angles are O(1e3), so a few-ulp f32 difference between
    # the MXU-accumulated angle and the reference's plain multiply translates
    # into up to ~1e-3 on cos/sin (error grows with |x|).  2e-2 leaves
    # headroom for that while still hard-failing on any structural bug or on a
    # low-precision (bf16) matmul, both of which give O(1) errors.
    ATOL = 2e-2

    # Case 1: d_model = 32 < 128 -> lane-packing path (k = 4) + row padding.
    d_model = 32
    x = jax.random.uniform(key0, (2, 4), dtype=jnp.float32) * 1000.0   # timesteps
    out = jax.block_until_ready(sinusoidal_pos_emb(x, d_model, base))
    ref = _reference(x, d_model, base)
    assert out.shape == (8, d_model), out.shape
    err = float(jnp.max(jnp.abs(out - ref)))
    assert jnp.allclose(out, ref, atol=ATOL), f"mismatch {err}"

    # Case 2: d_model = 128 -> k = 1 path, 2-step grid.
    d_model2 = 128
    x2 = jax.random.uniform(key1, (16,), dtype=jnp.float32) * 1000.0
    out2 = jax.block_until_ready(sinusoidal_pos_emb(x2, d_model2, base))
    ref2 = _reference(x2, d_model2, base)
    assert out2.shape == (16, d_model2), out2.shape
    err2 = float(jnp.max(jnp.abs(out2 - ref2)))
    assert jnp.allclose(out2, ref2, atol=ATOL), f"mismatch {err2}"

    print("KERNEL_OK")
</pallas_src>

<mosaic_0001>
module attributes {stable_mosaic.version = 11 : i64} {
  func.func @_sinusoidal_kernel(%arg0: i32, %arg1: memref<8x8xf32, #tpu.memory_space<vmem>>, %arg2: memref<8x128xf32, #tpu.memory_space<vmem>>, %arg3: memref<8x128xf32, #tpu.memory_space<vmem>>) attributes {dimension_semantics = [#tpu.dimension_semantics<parallel>], iteration_bounds = array<i64: 1>, scalar_prefetch = 0 : i64, scratch_operands = 0 : i64, tpu.core_type = #tpu.core_type<tc>, window_params = [{transform_indices = @transform_0, window_bounds = array<i64: 8, 8>}, {pipeline_mode = #tpu.pipeline_mode<synchronous>, transform_indices = @transform_1, window_bounds = array<i64: 8, 128>}, {transform_indices = @transform_2, window_bounds = array<i64: 8, 128>}]} {
    %c0 = arith.constant 0 : index
    %c0_0 = arith.constant 0 : index
    %0 = vector.load %arg1[%c0, %c0_0] : memref<8x8xf32, #tpu.memory_space<vmem>>, vector<8x8xf32>
    %c0_1 = arith.constant 0 : index
    %c0_2 = arith.constant 0 : index
    %1 = vector.load %arg2[%c0_1, %c0_2] : memref<8x128xf32, #tpu.memory_space<vmem>>, vector<8x128xf32>
    %cst = arith.constant dense<0.000000e+00> : vector<8x128xf32>
    %2 = tpu.matmul %0, %1, %cst {dimension_numbers = #tpu.dot_dimension_numbers<[1], [0], [0], [1], [0, 0, 1, 1], [], []>, precision = #tpu.contract_precision<fp32>} : vector<8x8xf32>, vector<8x128xf32>, vector<8x128xf32> -> vector<8x128xf32>
    %3 = math.cos %2 : vector<8x128xf32>
    %c0_3 = arith.constant 0 : index
    %c0_4 = arith.constant 0 : index
    %4 = vector.load %arg3[%c0_3, %c0_4] : memref<8x128xf32, #tpu.memory_space<vmem>>, vector<8x128xf32>
    tpu.vector_store %arg3[%c0_3, %c0_4], %3 {strides = array<i32>} : memref<8x128xf32, #tpu.memory_space<vmem>>, vector<8x128xf32>,
    return
  }
  func.func @transform_0(%arg0: i32) -> (i32, i32) {
    %c0_i32 = arith.constant 0 : i32
    %c0_i32_0 = arith.constant 0 : i32
    return %arg0, %c0_i32 : i32, i32
  }
  func.func @transform_1(%arg0: i32) -> (i32, i32) {
    %c0_i32 = arith.constant 0 : i32
    %c0_i32_0 = arith.constant 0 : i32
    %c0_i32_1 = arith.constant 0 : i32
    return %c0_i32, %c0_i32_0 : i32, i32
  }
  func.func @transform_2(%arg0: i32) -> (i32, i32) {
    %c0_i32 = arith.constant 0 : i32
    %c0_i32_0 = arith.constant 0 : i32
    return %arg0, %c0_i32 : i32, i32
  }
}

</mosaic_0001>

<llo_original>
// kernel: tpu_custom_call.1
$region0: #{tpu_custom_call.1}
  #allocation0 [shape = 'u32[]', space=smem, size = 0x4, offset = 0x4, fixed_abs, tag = 'smem constant byte address 0x4 - core index']
  #allocation1 [shape = 'u32[144,128]{1,0:T(1,128)}', space=vmem, size = 0x12000, scoped, tag = 'internal scratch']
  %s0 = inlined_call_operand.hbm [shape: f32[8,8], index: 0, kind: input, shape index: {}]
  %s1 = inlined_call_operand.hbm [shape: f32[8,128], index: 1, kind: input, shape index: {}]
  %s2 = inlined_call_operand.hbm [shape: f32[8,128], index: 2, kind: output, shape index: {}]
  %s3 = sld [smem:[#allocation0]]
  $region26: #{tpu_custom_call.1} parent=0
    _
  %s5 = ssub.s32 1, %s3
  %s6 = scalar_select 0, %s5, %s3
  $region1: #{tpu_custom_call.1} parent=0
    #allocation2 [shape = 'u8[4096]{0}', space=vmem, size = 0x1000, scoped, tag = 'input window, operand 0, single buffered']
    #allocation3 [shape = 's32[1]{0}', space=sflag, size = 0x4, scoped, tag = 'scoped memory for tpu_custom_call.1']
    #allocation4 [shape = 's32[1]{0}', space=sflag, size = 0x4, scoped, tag = 'scoped memory for tpu_custom_call.1']
    #allocation5 [shape = 'u8[4096]{0}', space=vmem, size = 0x1000, scoped, tag = 'input window, operand 1, single buffered']
    #allocation6 [shape = 's32[1]{0}', space=sflag, size = 0x4, scoped, tag = 'scoped memory for tpu_custom_call.1']
    #allocation7 [shape = 'u8[4096]{0}', space=vmem, size = 0x1000, scoped, tag = 'output window, operand 0, single buffered']
    %7 = vsyncpa [#allocation3], 0
    %8 = vsyncpa [#allocation6], 0
    %9 = vsyncpa [#allocation4], 0
    // Predicated region
    $region2: #{tpu_custom_call.1} parent=1 // pred_check
      _
    $region3: #{tpu_custom_call.1} parent=1 // pred_check_branch
      %11 = sbr.rel (0) target = $region5
    $region4: #{tpu_custom_call.1} parent=1 // pred_region
      %s13 = ssub.s32 128, 128
      %14 = vsyncadd [#allocation3], %s13
      %s16 = sshll.u32 [#allocation2], 4
      %s17 = int_to_ptr.vmem [resolvable:$true] %s16
      %19 = dma.hbm_to_vmem [thread:$0]  %s0, 128, %s17, [#allocation3]
    $region5: #{tpu_custom_call.1} parent=1 // pred_fallthru
      _
    // Predicated region
    $region6: #{tpu_custom_call.1} parent=1 // pred_check
      _
    $region7: #{tpu_custom_call.1} parent=1 // pred_check_branch
      %21 = sbr.rel (0) target = $region9
    $region8: #{tpu_custom_call.1} parent=1 // pred_region
      %s23 = ssub.s32 128, 128
      %24 = vsyncadd [#allocation6], %s23
      %s26 = sshll.u32 [#allocation5], 4
      %s27 = int_to_ptr.vmem [resolvable:$true] %s26
      %29 = dma.hbm_to_vmem [thread:$0]  %s1, 128, %s27, [#allocation6]
    $region9: #{tpu_custom_call.1} parent=1 // pred_fallthru
      _
    // Predicated region
    $region10: #{tpu_custom_call.1} parent=1 // pred_check
      _
    $region11: #{tpu_custom_call.1} parent=1 // pred_check_branch
      %31 = sbr.rel (0) target = $region13
    $region12: #{tpu_custom_call.1} parent=1 // pred_region
      %32 = dma.done [#allocation3], 128
    $region13: #{tpu_custom_call.1} parent=1 // pred_fallthru
      _
    // Predicated region
    $region14: #{tpu_custom_call.1} parent=1 // pred_check
      _
    $region15: #{tpu_custom_call.1} parent=1 // pred_check_branch
      %34 = sbr.rel (0) target = $region17
    $region16: #{tpu_custom_call.1} parent=1 // pred_region
      %35 = dma.done [#allocation6], 128
    $region17: #{tpu_custom_call.1} parent=1 // pred_fallthru
      _
    %v36 = vld [vmem:[#allocation2] sm:$0xff]
    %v37 = vld [vmem:[#allocation5] sm:$0xff]
    %vm38 = vcmask 64512
    %v40 = vsel %vm38, %v36, 0
    %42 = vmatprep.subr.mxu0 0.0
    %v43 = vand.u32 %v37, 4294901760
    %44 = vmatpush1.msra.mxu0 %v43
    %45 = vmatprep.subr.mxu0 0.0
    %46 = vmatpush1.msra.mxu0 0.0
    %47 = vmatprep.subr.mxu0 0.0
    %48 = vmatpush1.msra.mxu0 0.0
    %49 = vmatprep.subr.mxu0 0.0
    %50 = vmatpush1.msra.mxu0 0.0
    %51 = vmatprep.subr.mxu0 0.0
    %52 = vmatpush1.msra.mxu0 0.0
    %53 = vmatprep.subr.mxu0 0.0
    %54 = vmatpush1.msra.mxu0 0.0
    %55 = vmatprep.subr.mxu0 0.0
    %56 = vmatpush1.msra.mxu0 0.0
    %57 = vmatprep.subr.mxu0 0.0
    %58 = vmatpush1.msra.mxu0 0.0
    %59 = vmatprep.subr.mxu0 0.0
    %60 = vmatpush1.msra.mxu0 0.0
    %61 = vmatprep.subr.mxu0 0.0
    %62 = vmatpush1.msra.mxu0 0.0
    %63 = vmatprep.subr.mxu0 0.0
    %64 = vmatpush1.msra.mxu0 0.0
    %65 = vmatprep.subr.mxu0 0.0
    %66 = vmatpush1.msra.mxu0 0.0
    %67 = vmatprep.subr.mxu0 0.0
    %68 = vmatpush1.msra.mxu0 0.0
    %69 = vmatprep.subr.mxu0 0.0
    %70 = vmatpush1.msra.mxu0 0.0
    %71 = vmatprep.subr.mxu0 0.0
    %72 = vmatpush1.msra.mxu0 0.0
    %73 = vmatprep.subr.mxu0 0.0
    %74 = vmatpush1.msra.mxu0 0.0
    %75 = vmatprep.subr.mxu0 0.0
    %76 = vmatpush1.msra.mxu0 0.0
    %77 = vmatprep.subr.mxu0 0.0
    %78 = vmatpush1.msra.mxu0 0.0
    %79 = vmatprep.subr.mxu0 0.0
    %80 = vmatpush1.msra.mxu0 0.0
    %81 = vmatprep.subr.mxu0 0.0
    %82 = vmatpush1.msra.mxu0 0.0
    %83 = vmatprep.subr.mxu0 0.0
    %84 = vmatpush1.msra.mxu0 0.0
    %85 = vmatprep.subr.mxu0 0.0
    %86 = vmatpush1.msra.mxu0 0.0
    %87 = vmatprep.subr.mxu0 0.0
    %88 = vmatpush1.msra.mxu0 0.0
    %89 = vmatprep.subr.mxu0 0.0
    %90 = vmatpush1.msra.mxu0 0.0
    %91 = vmatprep.subr.mxu0 0.0
    %92 = vmatpush1.msra.mxu0 0.0
    %93 = vmatprep.subr.mxu0 0.0
    %94 = vmatpush1.msra.mxu0 0.0
    %95 = vmatprep.subr.mxu0 0.0
    %96 = vmatpush1.msra.mxu0 0.0
    %97 = vmatprep.subr.mxu0 0.0
    %98 = vmatpush1.msra.mxu0 0.0
    %99 = vmatprep.subr.mxu0 0.0
    %100 = vmatpush1.msra.mxu0 0.0
    %101 = vmatprep.subr.mxu0 0.0
    %102 = vmatpush1.msra.mxu0 0.0
    %103 = vmatprep.subr.mxu0 0.0
    %104 = vmatpush1.msra.mxu0 0.0
    %105 = vmatprep.subr.mxu0 0.0
    %106 = vmatpush1.msra.mxu0 0.0
    %107 = vmatprep.mubr.f32.mxu0 0.0
    %v108 = vand.u32 %v40, 4294901760
    %v109 = vsub.f32 %v40, %v108
    %v110 = vand.u32 %v109, 4294901760
    %v111 = vsub.f32 %v109, %v110
    %v112 = vand.u32 %v111, 4294901760
    %113 = vmatmul.mubr.f32.gmra.mrb[0].mxu0 %v112
    %v114 = vpop.f32.mrb[0].mxu0
    %v115 = vadd.f32 0.0, %v114
    %v116 = vpop.f32.mrb[0].mxu0
    %117 = vdwg.mxu0
    %118 = vmatprep.subr.mxu0 0.0
    %v119 = vand.u32 %v37, 4294901760
    %v120 = vsub.f32 %v37, %v119
    %v121 = vand.u32 %v120, 4294901760
    %v122 = vsub.f32 %v120, %v121
    %v123 = vand.u32 %v122, 4294901760
    %124 = vmatpush1.msra.mxu0 %v123
    %125 = vmatprep.subr.mxu0 0.0
    %126 = vmatpush1.msra.mxu0 0.0
    %127 = vmatprep.subr.mxu0 0.0
    %128 = vmatpush1.msra.mxu0 0.0
    %129 = vmatprep.subr.mxu0 0.0
    %130 = vmatpush1.msra.mxu0 0.0
    %131 = vmatprep.subr.mxu0 0.0
    %132 = vmatpush1.msra.mxu0 0.0
    %133 = vmatprep.subr.mxu0 0.0
    %134 = vmatpush1.msra.mxu0 0.0
    %135 = vmatprep.subr.mxu0 0.0
    %136 = vmatpush1.msra.mxu0 0.0
    %137 = vmatprep.subr.mxu0 0.0
    %138 = vmatpush1.msra.mxu0 0.0
    %139 = vmatprep.subr.mxu0 0.0
    %140 = vmatpush1.msra.mxu0 0.0
    %141 = vmatprep.subr.mxu0 0.0
    %142 = vmatpush1.msra.mxu0 0.0
    %143 = vmatprep.subr.mxu0 0.0
    %144 = vmatpush1.msra.mxu0 0.0
    %145 = vmatprep.subr.mxu0 0.0
    %146 = vmatpush1.msra.mxu0 0.0
    %147 = vmatprep.subr.mxu0 0.0
    %148 = vmatpush1.msra.mxu0 0.0
    %149 = vmatprep.subr.mxu0 0.0
    %150 = vmatpush1.msra.mxu0 0.0
    %151 = vmatprep.subr.mxu0 0.0
    %152 = vmatpush1.msra.mxu0 0.0
    %153 = vmatprep.subr.mxu0 0.0
    %154 = vmatpush1.msra.mxu0 0.0
    %155 = vmatprep.subr.mxu0 0.0
    %156 = vmatpush1.msra.mxu0 0.0
    %157 = vmatprep.subr.mxu0 0.0
    %158 = vmatpush1.msra.mxu0 0.0
    %159 = vmatprep.subr.mxu0 0.0
    %160 = vmatpush1.msra.mxu0 0.0
    %161 = vmatprep.subr.mxu0 0.0
    %162 = vmatpush1.msra.mxu0 0.0
    %163 = vmatprep.subr.mxu0 0.0
    %164 = vmatpush1.msra.mxu0 0.0
    %165 = vmatprep.subr.mxu0 0.0
    %166 = vmatpush1.msra.mxu0 0.0
    %167 = vmatprep.subr.mxu0 0.0
    %168 = vmatpush1.msra.mxu0 0.0
    %169 = vmatprep.subr.mxu0 0.0
    %170 = vmatpush1.msra.mxu0 0.0
    %171 = vmatprep.subr.mxu0 0.0
    %172 = vmatpush1.msra.mxu0 0.0
    %173 = vmatprep.subr.mxu0 0.0
    %174 = vmatpush1.msra.mxu0 0.0
    %175 = vmatprep.subr.mxu0 0.0
    %176 = vmatpush1.msra.mxu0 0.0
    %177 = vmatprep.subr.mxu0 0.0
    %178 = vmatpush1.msra.mxu0 0.0
    %179 = vmatprep.subr.mxu0 0.0
    %180 = vmatpush1.msra.mxu0 0.0
    %181 = vmatprep.subr.mxu0 0.0
    %182 = vmatpush1.msra.mxu0 0.0
    %183 = vmatprep.subr.mxu0 0.0
    %184 = vmatpush1.msra.mxu0 0.0
    %185 = vmatprep.subr.mxu0 0.0
    %186 = vmatpush1.msra.mxu0 0.0
    %187 = vmatprep.mubr.f32.mxu0 0.0
    %v188 = vand.u32 %v40, 4294901760
    %189 = vmatmul.mubr.f32.gmra.mrb[0].mxu0 %v188
    %v190 = vpop.f32.mrb[0].mxu0
    %v191 = vadd.f32 %v115, %v190
    %v192 = vpop.f32.mrb[0].mxu0
    %193 = vdwg.mxu0
    %194 = vmatprep.subr.mxu0 0.0
    %v195 = vand.u32 %v37, 4294901760
    %v196 = vsub.f32 %v37, %v195
    %197 = vmatpush1.msra.mxu0 %v196
    %198 = vmatprep.subr.mxu0 0.0
    %199 = vmatpush1.msra.mxu0 0.0
    %200 = vmatprep.subr.mxu0 0.0
    %201 = vmatpush1.msra.mxu0 0.0
    %202 = vmatprep.subr.mxu0 0.0
    %203 = vmatpush1.msra.mxu0 0.0
    %204 = vmatprep.subr.mxu0 0.0
    %205 = vmatpush1.msra.mxu0 0.0
    %206 = vmatprep.subr.mxu0 0.0
    %207 = vmatpush1.msra.mxu0 0.0
    %208 = vmatprep.subr.mxu0 0.0
    %209 = vmatpush1.msra.mxu0 0.0
    %210 = vmatprep.subr.mxu0 0.0
    %211 = vmatpush1.msra.mxu0 0.0
    %212 = vmatprep.subr.mxu0 0.0
    %213 = vmatpush1.msra.mxu0 0.0
    %214 = vmatprep.subr.mxu0 0.0
    %215 = vmatpush1.msra.mxu0 0.0
    %216 = vmatprep.subr.mxu0 0.0
    %217 = vmatpush1.msra.mxu0 0.0
    %218 = vmatprep.subr.mxu0 0.0
    %219 = vmatpush1.msra.mxu0 0.0
    %220 = vmatprep.subr.mxu0 0.0
    %221 = vmatpush1.msra.mxu0 0.0
    %222 = vmatprep.subr.mxu0 0.0
    %223 = vmatpush1.msra.mxu0 0.0
    %224 = vmatprep.subr.mxu0 0.0
    %225 = vmatpush1.msra.mxu0 0.0
    %226 = vmatprep.subr.mxu0 0.0
    %227 = vmatpush1.msra.mxu0 0.0
    %228 = vmatprep.subr.mxu0 0.0
    %229 = vmatpush1.msra.mxu0 0.0
    %230 = vmatprep.subr.mxu0 0.0
    %231 = vmatpush1.msra.mxu0 0.0
    %232 = vmatprep.subr.mxu0 0.0
    %233 = vmatpush1.msra.mxu0 0.0
    %234 = vmatprep.subr.mxu0 0.0
    %235 = vmatpush1.msra.mxu0 0.0
    %236 = vmatprep.subr.mxu0 0.0
    %237 = vmatpush1.msra.mxu0 0.0
    %238 = vmatprep.subr.mxu0 0.0
    %239 = vmatpush1.msra.mxu0 0.0
    %240 = vmatprep.subr.mxu0 0.0
    %241 = vmatpush1.msra.mxu0 0.0
    %242 = vmatprep.subr.mxu0 0.0
    %243 = vmatpush1.msra.mxu0 0.0
    %244 = vmatprep.subr.mxu0 0.0
    %245 = vmatpush1.msra.mxu0 0.0
    %246 = vmatprep.subr.mxu0 0.0
    %247 = vmatpush1.msra.mxu0 0.0
    %248 = vmatprep.subr.mxu0 0.0
    %249 = vmatpush1.msra.mxu0 0.0
    %250 = vmatprep.subr.mxu0 0.0
    %251 = vmatpush1.msra.mxu0 0.0
    %252 = vmatprep.subr.mxu0 0.0
    %253 = vmatpush1.msra.mxu0 0.0
    %254 = vmatprep.subr.mxu0 0.0
    %255 = vmatpush1.msra.mxu0 0.0
    %256 = vmatprep.subr.mxu0 0.0
    %257 = vmatpush1.msra.mxu0 0.0
    %258 = vmatprep.subr.mxu0 0.0
    %259 = vmatpush1.msra.mxu0 0.0
    %260 = vmatprep.mubr.f32.mxu0 0.0
    %v261 = vand.u32 %v40, 4294901760
    %v262 = vsub.f32 %v40, %v261
    %263 = vmatmul.mubr.f32.gmra.mrb[0].mxu0 %v262
    %v264 = vpop.f32.mrb[0].mxu0
    %v265 = vadd.f32 %v191, %v264
    %v266 = vpop.f32.mrb[0].mxu0
    %267 = vdwg.mxu0
    %268 = vmatprep.subr.mxu0 0.0
    %v269 = vand.u32 %v37, 4294901760
    %270 = vmatpush1.msra.mxu0 %v269
    %271 = vmatprep.subr.mxu0 0.0
    %272 = vmatpush1.msra.mxu0 0.0
    %273 = vmatprep.subr.mxu0 0.0
    %274 = vmatpush1.msra.mxu0 0.0
    %275 = vmatprep.subr.mxu0 0.0
    %276 = vmatpush1.msra.mxu0 0.0
    %277 = vmatprep.subr.mxu0 0.0
    %278 = vmatpush1.msra.mxu0 0.0
    %279 = vmatprep.subr.mxu0 0.0
    %280 = vmatpush1.msra.mxu0 0.0
    %281 = vmatprep.subr.mxu0 0.0
    %282 = vmatpush1.msra.mxu0 0.0
    %283 = vmatprep.subr.mxu0 0.0
    %284 = vmatpush1.msra.mxu0 0.0
    %285 = vmatprep.subr.mxu0 0.0
    %286 = vmatpush1.msra.mxu0 0.0
    %287 = vmatprep.subr.mxu0 0.0
    %288 = vmatpush1.msra.mxu0 0.0
    %289 = vmatprep.subr.mxu0 0.0
    %290 = vmatpush1.msra.mxu0 0.0
    %291 = vmatprep.subr.mxu0 0.0
    %292 = vmatpush1.msra.mxu0 0.0
    %293 = vmatprep.subr.mxu0 0.0
    %294 = vmatpush1.msra.mxu0 0.0
    %295 = vmatprep.subr.mxu0 0.0
    %296 = vmatpush1.msra.mxu0 0.0
    %297 = vmatprep.subr.mxu0 0.0
    %298 = vmatpush1.msra.mxu0 0.0
    %299 = vmatprep.subr.mxu0 0.0
    %300 = vmatpush1.msra.mxu0 0.0
    %301 = vmatprep.subr.mxu0 0.0
    %302 = vmatpush1.msra.mxu0 0.0
    %303 = vmatprep.subr.mxu0 0.0
    %304 = vmatpush1.msra.mxu0 0.0
    %305 = vmatprep.subr.mxu0 0.0
    %306 = vmatpush1.msra.mxu0 0.0
    %307 = vmatprep.subr.mxu0 0.0
    %308 = vmatpush1.msra.mxu0 0.0
    %309 = vmatprep.subr.mxu0 0.0
    %310 = vmatpush1.msra.mxu0 0.0
    %311 = vmatprep.subr.mxu0 0.0
    %312 = vmatpush1.msra.mxu0 0.0
    %313 = vmatprep.subr.mxu0 0.0
    %314 = vmatpush1.msra.mxu0 0.0
    %315 = vmatprep.subr.mxu0 0.0
    %316 = vmatpush1.msra.mxu0 0.0
    %317 = vmatprep.subr.mxu0 0.0
    %318 = vmatpush1.msra.mxu0 0.0
    %319 = vmatprep.subr.mxu0 0.0
    %320 = vmatpush1.msra.mxu0 0.0
    %321 = vmatprep.subr.mxu0 0.0
    %322 = vmatpush1.msra.mxu0 0.0
    %323 = vmatprep.subr.mxu0 0.0
    %324 = vmatpush1.msra.mxu0 0.0
    %325 = vmatprep.subr.mxu0 0.0
    %326 = vmatpush1.msra.mxu0 0.0
    %327 = vmatprep.subr.mxu0 0.0
    %328 = vmatpush1.msra.mxu0 0.0
    %329 = vmatprep.subr.mxu0 0.0
    %330 = vmatpush1.msra.mxu0 0.0
    %331 = vmatprep.subr.mxu0 0.0
    %332 = vmatpush1.msra.mxu0 0.0
    %333 = vmatprep.mubr.f32.mxu0 0.0
    %v334 = vand.u32 %v40, 4294901760
    %v335 = vsub.f32 %v40, %v334
    %v336 = vand.u32 %v335, 4294901760
    %337 = vmatmul.mubr.f32.gmra.mrb[0].mxu0 %v336
    %v338 = vpop.f32.mrb[0].mxu0
    %v339 = vadd.f32 %v265, %v338
    %v340 = vpop.f32.mrb[0].mxu0
    %341 = vdwg.mxu0
    %342 = vmatprep.subr.mxu0 0.0
    %v343 = vand.u32 %v37, 4294901760
    %v344 = vsub.f32 %v37, %v343
    %v345 = vand.u32 %v344, 4294901760
    %346 = vmatpush1.msra.mxu0 %v345
    %347 = vmatprep.subr.mxu0 0.0
    %348 = vmatpush1.msra.mxu0 0.0
    %349 = vmatprep.subr.mxu0 0.0
    %350 = vmatpush1.msra.mxu0 0.0
    %351 = vmatprep.subr.mxu0 0.0
    %352 = vmatpush1.msra.mxu0 0.0
    %353 = vmatprep.subr.mxu0 0.0
    %354 = vmatpush1.msra.mxu0 0.0
    %355 = vmatprep.subr.mxu0 0.0
    %356 = vmatpush1.msra.mxu0 0.0
    %357 = vmatprep.subr.mxu0 0.0
    %358 = vmatpush1.msra.mxu0 0.0
    %359 = vmatprep.subr.mxu0 0.0
    %360 = vmatpush1.msra.mxu0 0.0
    %361 = vmatprep.subr.mxu0 0.0
    %362 = vmatpush1.msra.mxu0 0.0
    %363 = vmatprep.subr.mxu0 0.0
    %364 = vmatpush1.msra.mxu0 0.0
    %365 = vmatprep.subr.mxu0 0.0
    %366 = vmatpush1.msra.mxu0 0.0
    %367 = vmatprep.subr.mxu0 0.0
    %368 = vmatpush1.msra.mxu0 0.0
    %369 = vmatprep.subr.mxu0 0.0
    %370 = vmatpush1.msra.mxu0 0.0
    %371 = vmatprep.subr.mxu0 0.0
    %372 = vmatpush1.msra.mxu0 0.0
    %373 = vmatprep.subr.mxu0 0.0
    %374 = vmatpush1.msra.mxu0 0.0
    %375 = vmatprep.subr.mxu0 0.0
    %376 = vmatpush1.msra.mxu0 0.0
    %377 = vmatprep.subr.mxu0 0.0
    %378 = vmatpush1.msra.mxu0 0.0
    %379 = vmatprep.subr.mxu0 0.0
    %380 = vmatpush1.msra.mxu0 0.0
    %381 = vmatprep.subr.mxu0 0.0
    %382 = vmatpush1.msra.mxu0 0.0
    %383 = vmatprep.subr.mxu0 0.0
    %384 = vmatpush1.msra.mxu0 0.0
    %385 = vmatprep.subr.mxu0 0.0
    %386 = vmatpush1.msra.mxu0 0.0
    %387 = vmatprep.subr.mxu0 0.0
    %388 = vmatpush1.msra.mxu0 0.0
    %389 = vmatprep.subr.mxu0 0.0
    %390 = vmatpush1.msra.mxu0 0.0
    %391 = vmatprep.subr.mxu0 0.0
    %392 = vmatpush1.msra.mxu0 0.0
    %393 = vmatprep.subr.mxu0 0.0
    %394 = vmatpush1.msra.mxu0 0.0
    %395 = vmatprep.subr.mxu0 0.0
    %396 = vmatpush1.msra.mxu0 0.0
    %397 = vmatprep.subr.mxu0 0.0
    %398 = vmatpush1.msra.mxu0 0.0
    %399 = vmatprep.subr.mxu0 0.0
    %400 = vmatpush1.msra.mxu0 0.0
    %401 = vmatprep.subr.mxu0 0.0
    %402 = vmatpush1.msra.mxu0 0.0
    %403 = vmatprep.subr.mxu0 0.0
    %404 = vmatpush1.msra.mxu0 0.0
    %405 = vmatprep.subr.mxu0 0.0
    %406 = vmatpush1.msra.mxu0 0.0
    %407 = vmatprep.subr.mxu0 0.0
    %408 = vmatpush1.msra.mxu0 0.0
    %409 = vmatprep.mubr.f32.mxu0 0.0
    %v410 = vand.u32 %v40, 4294901760
    %411 = vmatmul.mubr.f32.gmra.mrb[0].mxu0 %v410
    %v412 = vpop.f32.mrb[0].mxu0
    %v413 = vadd.f32 %v339, %v412
    %v414 = vpop.f32.mrb[0].mxu0
    %415 = vdwg.mxu0
    %416 = vmatprep.subr.mxu0 0.0
    %v417 = vand.u32 %v37, 4294901760
    %418 = vmatpush1.msra.mxu0 %v417
    %419 = vmatprep.subr.mxu0 0.0
    %420 = vmatpush1.msra.mxu0 0.0
    %421 = vmatprep.subr.mxu0 0.0
    %422 = vmatpush1.msra.mxu0 0.0
    %423 = vmatprep.subr.mxu0 0.0
    %424 = vmatpush1.msra.mxu0 0.0
    %425 = vmatprep.subr.mxu0 0.0
    %426 = vmatpush1.msra.mxu0 0.0
    %427 = vmatprep.subr.mxu0 0.0
    %428 = vmatpush1.msra.mxu0 0.0
    %429 = vmatprep.subr.mxu0 0.0
    %430 = vmatpush1.msra.mxu0 0.0
    %431 = vmatprep.subr.mxu0 0.0
    %432 = vmatpush1.msra.mxu0 0.0
    %433 = vmatprep.subr.mxu0 0.0
    %434 = vmatpush1.msra.mxu0 0.0
    %435 = vmatprep.subr.mxu0 0.0
    %436 = vmatpush1.msra.mxu0 0.0
    %437 = vmatprep.subr.mxu0 0.0
    %438 = vmatpush1.msra.mxu0 0.0
    %439 = vmatprep.subr.mxu0 0.0
    %440 = vmatpush1.msra.mxu0 0.0
    %441 = vmatprep.subr.mxu0 0.0
    %442 = vmatpush1.msra.mxu0 0.0
    %443 = vmatprep.subr.mxu0 0.0
    %444 = vmatpush1.msra.mxu0 0.0
    %445 = vmatprep.subr.mxu0 0.0
    %446 = vmatpush1.msra.mxu0 0.0
    %447 = vmatprep.subr.mxu0 0.0
    %448 = vmatpush1.msra.mxu0 0.0
    %449 = vmatprep.subr.mxu0 0.0
    %450 = vmatpush1.msra.mxu0 0.0
    %451 = vmatprep.subr.mxu0 0.0
    %452 = vmatpush1.msra.mxu0 0.0
    %453 = vmatprep.subr.mxu0 0.0
    %454 = vmatpush1.msra.mxu0 0.0
    %455 = vmatprep.subr.mxu0 0.0
    %456 = vmatpush1.msra.mxu0 0.0
    %457 = vmatprep.subr.mxu0 0.0
    %458 = vmatpush1.msra.mxu0 0.0
    %459 = vmatprep.subr.mxu0 0.0
    %460 = vmatpush1.msra.mxu0 0.0
    %461 = vmatprep.subr.mxu0 0.0
    %462 = vmatpush1.msra.mxu0 0.0
    %463 = vmatprep.subr.mxu0 0.0
    %464 = vmatpush1.msra.mxu0 0.0
    %465 = vmatprep.subr.mxu0 0.0
    %466 = vmatpush1.msra.mxu0 0.0
    %467 = vmatprep.subr.mxu0 0.0
    %468 = vmatpush1.msra.mxu0 0.0
    %469 = vmatprep.subr.mxu0 0.0
    %470 = vmatpush1.msra.mxu0 0.0
    %471 = vmatprep.subr.mxu0 0.0
    %472 = vmatpush1.msra.mxu0 0.0
    %473 = vmatprep.subr.mxu0 0.0
    %474 = vmatpush1.msra.mxu0 0.0
    %475 = vmatprep.subr.mxu0 0.0
    %476 = vmatpush1.msra.mxu0 0.0
    %477 = vmatprep.subr.mxu0 0.0
    %478 = vmatpush1.msra.mxu0 0.0
    %479 = vmatprep.subr.mxu0 0.0
    %480 = vmatpush1.msra.mxu0 0.0
    %481 = vmatprep.mubr.f32.mxu0 0.0
    %v482 = vand.u32 %v40, 4294901760
    %483 = vmatmul.mubr.f32.gmra.mrb[0].mxu0 %v482
    %v484 = vpop.f32.mrb[0].mxu0
    %v485 = vadd.f32 %v413, %v484
    %v486 = vpop.f32.mrb[0].mxu0
    %487 = vdwg.mxu0
    %v488 = vand.u32 2147483647, %v485
    %vm489 = vcmp.le.f32.partialorder %v488, 0.7853982
    %vm490 = vcmp.lt.s32.totalorder %v485, 0
    %v491 = vand.u32 %v485, 2139095040
    %v492 = vshrl.u32 %v491, 23
    %v493 = vsub.s32 %v492, 127
    %v494 = vand.u32 2147483647, %v485
    %v495 = vand.u32 %v494, 8388607
    %v496 = vor.u32 %v495, 8388608
    %v497 = vsub.s32 0, %v496
    %v498 = vadd.s32 %v493, 1
    %vm499 = vcmp.gt.s32.totalorder %v498, 0
    %v500 = vsel %vm499, %v498, 0
    %v501 = vshrl.u32 %v500, 5
    %v502 = vand.u32 %v500, 31
    %v503 = vsub.s32 32, %v502
    %v504 = vshrl.u32 683565275, %v503
    %v505 = vshll.u32 683565275, %v502
    %v506 = vshrl.u32 2475754826, %v503
    %v507 = vor.u32 %v505, %v506
    %v508 = vshll.u32 2475754826, %v502
    %v509 = vshrl.u32 2131351028, %v503
    %v510 = vor.u32 %v508, %v509
    %v511 = vshll.u32 2131351028, %v502
    %v512 = vshrl.u32 2102212464, %v503
    %v513 = vor.u32 %v511, %v512
    %v514 = vshll.u32 2102212464, %v502
    %v515 = vshrl.u32 920167782, %v503
    %v516 = vor.u32 %v514, %v515
    %v517 = vshll.u32 920167782, %v502
    %v518 = vshrl.u32 1326507024, %v503
    %v519 = vor.u32 %v517, %v518
    %vm520 = vcmp.lt.s32.totalorder %v501, 1
    %vm521 = vcmp.lt.s32.totalorder %v501, 2
    %vm522 = vcmp.lt.s32.totalorder %v501, 3
    %vm523 = vcmp.lt.s32.totalorder %v501, 4
    %v524 = vsel %vm520, %v504, %v507
    %v525 = vsel %vm523, %v513, 2102212464
    %v526 = vsel %vm522, %v510, %v525
    %v527 = vsel %vm521, %v524, %v526
    %v528 = vsel %vm520, %v507, %v510
    %v529 = vsel %vm523, %v516, 920167782
    %v530 = vsel %vm522, %v513, %v529
    %v531 = vsel %vm521, %v528, %v530
    %v532 = vsel %vm520, %v510, %v513
    %v533 = vsel %vm523, %v519, 1326507024
    %v534 = vsel %vm522, %v516, %v533
    %v535 = vsel %vm521, %v532, %v534
    %v536 = vshll.u32 %v496, 8
    %v537 = vmul.u32.u64.compose %v536, %v535
    %v538 = vextract.low.u32 %v537
    %v539 = vextract.high.u32 %v537
    %v540 = vmul.u32.u64.compose %v536, %v531
    %v541 = vextract.low.u32 %v540
    %v542 = vextract.high.u32 %v540
    %v543 = vmul.u32 %v536, %v527
    %v544 = vadd.s32 %v539, %v541
    %vm545 = vc.u32 %v539, %v541
    %v546 = vadd.s32 %v542, 1
    %v547 = vsel %vm545, %v546, %v542
    %v548 = vadd.s32 %v543, %v547
    %v549 = vadd.s32 %v548, 536870912
    %v550 = vshrl.u32 %v549, 30
    %v551 = vshll.u32 %v550, 30
    %v552 = vsub.s32 %v548, %v551
    %vm553 = vcmp.lt.s32.totalorder %v552, 0
    %v554 = vsub.s32 0, %v552
    %v555 = vsel %vm553, %v554, %v552
    %v556 = vclz %v555
    %v557 = vsub.s32 %v556, 2
    %vm558 = vcmp.gt.s32.totalorder 0, %v557
    %v559 = vsel %vm558, 0, %v557
    %v560 = vsub.s32 32, %v559
    %v561 = vshll.u32 %v552, %v559
    %v562 = vshrl.u32 %v544, %v560
    %v563 = vor.u32 %v561, %v562
    %v564 = vsub.s32 4294967266, %v559
    %v565 = vadd.s32 %v564, 127
    %v566 = vshll.u32 %v565, 23
    %v567 = vor.u32 4788187, %v566
    %v568 = vand.u32 2147483647, %v567
    %v570 = vcvt.s32.f32 %v563
    %v571 = vmul.f32 %v570, %v568
    %v572 = vxor.u32 %v571, 2147483648
    %v573 = vsel %vm490, %v572, %v571
    %v574 = vsub.s32 4, %v550
    %v575 = vsel %vm490, %v574, %v550
    %v576 = vsel %vm489, %v485, %v573
    %v577 = vsel %vm489, 0, %v575
    %v578 = vcosq.f32.pop %v576
    %v579 = vsinq.f32.pop %v576
    %vm580 = vweird.f32 %v485
    %v581 = vand.u32 %v577, 3
    %vm582 = vcmp.lt.s32.totalorder %v581, 2
    %vm583 = vcmp.eq.s32.totalorder %v581, 0
    %v584 = vxor.u32 %v579, 2147483648
    %v585 = vsel %vm583, %v578, %v584
    %vm586 = vcmp.eq.s32.totalorder %v581, 2
    %v587 = vxor.u32 %v578, 2147483648
    %v588 = vsel %vm586, %v587, %v579
    %v589 = vsel %vm582, %v585, %v588
    %v590 = vsel %vm580, nan, %v589
    %591 = vst [vmem:[#allocation7] sm:$0xff] %v590
    // Predicated region
    $region18: #{tpu_custom_call.1} parent=1 // pred_check
      _
    $region19: #{tpu_custom_call.1} parent=1 // pred_check_branch
      %593 = sbr.rel (0) target = $region21
    $region20: #{tpu_custom_call.1} parent=1 // pred_region
      %s595 = ssub.s32 128, 128
      %596 = vsyncadd [#allocation4], %s595
      %s598 = sshll.u32 [#allocation7], 4
      %s599 = int_to_ptr.vmem [resolvable:$true] %s598
      %601 = dma.vmem_to_hbm [thread:$0]  %s599, 128, %s2, [#allocation4]
    $region21: #{tpu_custom_call.1} parent=1 // pred_fallthru
      _
    // Predicated region
    $region22: #{tpu_custom_call.1} parent=1 // pred_check
      _
    $region23: #{tpu_custom_call.1} parent=1 // pred_check_branch
      %603 = sbr.rel (0) target = $region25
    $region24: #{tpu_custom_call.1} parent=1 // pred_region
      %604 = dma.done [#allocation4], 128
    $region25: #{tpu_custom_call.1} parent=1 // pred_fallthru
      _
    %605 = vsyncpa [#allocation3], 1
    %606 = vsyncpa [#allocation6], 1
    %607 = vsyncpa [#allocation4], 1

</llo_original>
